<compile_context>
chip_gen: v7x
topology: tpu7x:2x2x1
jax: 0.10.0
libtpu: 0.0.40
codegen_flags: <defaults>
</compile_context>

<pallas_src>
import math

import jax
import jax.numpy as jnp
from jax.experimental import pallas as pl
from jax.experimental.pallas import tpu as pltpu

OUTPUT_DIM = 128  # required by x.view(-1, 128) in the reference forward

# (C_in, C_out, K, stride, pad) for the three Conv2d(., ., kernel=(1,K)) stages
STAGES = [(1, 32, 7, 7, 7), (32, 64, 2, 1, 1), (64, OUTPUT_DIM, 2, 1, 1)]

_PAD_RAW = 5.0  # raw value that clamp(-7,17) + minmax(-7,17 -> -1,1) maps to exactly 0.0


# ----------------------------------------------------------------------------- glue
def _minmax(x, lo, hi, new_lo, new_hi):
    return (x - lo) / (hi - lo) * (new_hi - new_lo) + new_lo


def _xavier_uniform(key, shape, gain=1.414):
    cout, cin, kh, kw = shape
    fan_in, fan_out = cin * kh * kw, cout * kh * kw
    bound = gain * math.sqrt(6.0 / (fan_in + fan_out))
    return jax.random.uniform(key, shape, jnp.float32, -bound, bound)


def init_params(key):
    params = []
    for (cin, cout, k, _s, _p) in STAGES:
        key, kw_, kb_ = jax.random.split(key, 3)
        w = _xavier_uniform(kw_, (cout, cin, 1, k))              # torch conv layout OIHW
        b_bound = 1.0 / math.sqrt(cin * k)
        b = jax.random.uniform(kb_, (cout,), jnp.float32, -b_bound, b_bound)
        params.append((w, b))
    return params


def _widths(L):
    """Static per-stage widths implied by the conv/pool arithmetic."""
    w1 = (L + 2 * 7 - 7) // 7 + 1          # conv1: k=7, s=7, p=7
    wp1 = w1 // 2                          # max_pool2d k=(1,2)
    w2 = wp1 + 1                           # conv2: k=2, s=1, p=1
    wp2 = w2 // 2                          # max_pool2d k=(1,2)
    w3 = wp2 + 1                           # conv3: k=2, s=1, p=1
    return w1, wp1, w2, wp2, w3


# ----------------------------------------------------------------------------- kernel
def _l2norm_relu(y):
    """F.normalize(p=2, dim=channels) + ReLU via EUP rsqrt (eps^2 == 1e-24 matches
    the max(norm, 1e-12) clamp of F.normalize)."""
    ss = jnp.sum(y * y, axis=-1, keepdims=True)
    return jnp.maximum(y * jax.lax.rsqrt(jnp.maximum(ss, 1e-24)), 0.0)


def _make_fused_kernel(TB, W1, WP1, W2, WP2, W3):
    """One kernel = conv1 + norm + relu + pool + conv2 + ... + global max-pool."""

    def pool_and_conv_taps(h_ref, seg_w, pool_w, cin):
        """max_pool2d(k=(1,2)) then build the two k=2 conv taps (with pad=1),
        flattened over the TB samples of this grid step."""
        zero = jnp.zeros((1, cin), jnp.float32)
        lhs, rhs = [], []
        for b in range(TB):
            even = h_ref[pl.ds(b * seg_w, pool_w, stride=2), :]
            odd = h_ref[pl.ds(b * seg_w + 1, pool_w, stride=2), :]
            pooled = jnp.maximum(even, odd)                       # (pool_w, cin)
            lhs.append(jnp.concatenate([zero, pooled], axis=0))   # tap k=0: x_pad[j]
            rhs.append(jnp.concatenate([pooled, zero], axis=0))   # tap k=1: x_pad[j+1]
        return jnp.concatenate(lhs, axis=0), jnp.concatenate(rhs, axis=0)

    def kernel(p_ref, w1_ref, b1_ref, w2a_ref, w2b_ref, b2_ref,
               w3a_ref, w3b_ref, b3_ref, o_ref, h1_ref, h2_ref):
        # pad_sequence post-processing fused in-kernel: clamp(-7,17) + minmax -> [-1,1]
        p = _minmax(jnp.clip(p_ref[...], -7.0, 17.0), -7.0, 17.0, -1.0, 1.0)

        # stage 1: conv(1->32, k=7, s=7, p=7) == one (TB*W1, 7) @ (7, 32) MXU matmul
        y = jnp.dot(p, w1_ref[...], preferred_element_type=jnp.float32) + b1_ref[...]
        h1_ref[...] = _l2norm_relu(y)                             # stays in VMEM

        # max-pool + stage 2: conv(32->64, k=2, s=1, p=1) as two matmuls
        l, r = pool_and_conv_taps(h1_ref, W1, WP1, 32)            # each (TB*W2, 32)
        y = (jnp.dot(l, w2a_ref[...], preferred_element_type=jnp.float32)
             + jnp.dot(r, w2b_ref[...], preferred_element_type=jnp.float32)
             + b2_ref[...])
        h2_ref[...] = _l2norm_relu(y)                             # stays in VMEM

        # max-pool + stage 3: conv(64->128, k=2, s=1, p=1)
        l, r = pool_and_conv_taps(h2_ref, W2, WP2, 64)            # each (TB*W3, 64)
        y = (jnp.dot(l, w3a_ref[...], preferred_element_type=jnp.float32)
             + jnp.dot(r, w3b_ref[...], preferred_element_type=jnp.float32)
             + b3_ref[...])
        y = _l2norm_relu(y)                                       # (TB*W3, 128)

        # adaptive_max_pool2d(., 1): global max over width, per sample (lane-dense store)
        o_ref[...] = jnp.concatenate(
            [jnp.max(y[b * W3:(b + 1) * W3, :], axis=0, keepdims=True)
             for b in range(TB)], axis=0)

    return kernel


# ----------------------------------------------------------------------------- forward
def listflow_cnn_forward(x_padded, params, block_b=8):
    """x_padded: (B, L) float32, the dense length-padded batch (padding value 0.0)."""
    B, L = x_padded.shape
    assert B >= 1 and L >= 1
    W1, WP1, W2, WP2, W3 = _widths(L)

    # stage-1 patches: pure pad + reshape (stride == kernel == 7) -> (B, W1, 7).
    # Conv-pad positions carry _PAD_RAW so the in-kernel clamp+minmax maps them to 0.0.
    xp = jnp.pad(x_padded, ((0, 0), (7, 7 * W1 - L - 7)), constant_values=_PAD_RAW)
    patches = xp.reshape(B, W1, 7)

    # batch tiling: TB samples per grid step, flattened into the matmul M dimension.
    if B <= block_b:
        TB, Bp = B, B
    else:
        TB = block_b                                   # 8 keeps block sublanes %8 == 0
        Bp = ((B + TB - 1) // TB) * TB
        patches = jnp.pad(patches, ((0, Bp - B), (0, 0), (0, 0)),
                          constant_values=_PAD_RAW)
    patches = patches.reshape(Bp * W1, 7)

    # weights: torch OIHW -> per-tap (C_in, C_out) matmul matrices
    (w1, b1), (w2, b2), (w3, b3) = params
    w1m = jnp.transpose(w1[:, 0, 0, :], (1, 0))        # (7, 32)
    w2a = jnp.transpose(w2[:, :, 0, 0], (1, 0))        # (32, 64), tap k=0
    w2b = jnp.transpose(w2[:, :, 0, 1], (1, 0))        # (32, 64), tap k=1
    w3a = jnp.transpose(w3[:, :, 0, 0], (1, 0))        # (64, 128)
    w3b = jnp.transpose(w3[:, :, 0, 1], (1, 0))
    b1m, b2m, b3m = b1.reshape(1, -1), b2.reshape(1, -1), b3.reshape(1, -1)

    rep = lambda i: (0, 0)                             # weights: same block every step
    out = pl.pallas_call(
        _make_fused_kernel(TB, W1, WP1, W2, WP2, W3),
        out_shape=jax.ShapeDtypeStruct((Bp, OUTPUT_DIM), jnp.float32),
        grid=(Bp // TB,),
        in_specs=[
            pl.BlockSpec((TB * W1, 7), lambda i: (i, 0)),
            pl.BlockSpec((7, 32), rep), pl.BlockSpec((1, 32), rep),
            pl.BlockSpec((32, 64), rep), pl.BlockSpec((32, 64), rep),
            pl.BlockSpec((1, 64), rep),
            pl.BlockSpec((64, 128), rep), pl.BlockSpec((64, 128), rep),
            pl.BlockSpec((1, 128), rep),
        ],
        out_specs=pl.BlockSpec((TB, OUTPUT_DIM), lambda i: (i, 0)),
        scratch_shapes=[
            pltpu.VMEM((TB * W1, 32), jnp.float32),    # stage-1 activations (VMEM only)
            pltpu.VMEM((TB * W2, 64), jnp.float32),    # stage-2 activations (VMEM only)
        ],
        compiler_params=pltpu.CompilerParams(dimension_semantics=("parallel",)),
    )(patches, w1m, b1m, w2a, w2b, b2m, w3a, w3b, b3m)

    # TODO(synk): max-pool `indices` / batch_tree.set bookkeeping side-outputs
    # ('conv_x', 'vf_indices i', 'vf_shape i') are not produced (not part of the
    # returned tensor).
    return out[:B].reshape(-1, OUTPUT_DIM)             # == x.view(-1, 128)


# ----------------------------------------------------------------------------- reference
def _reference_forward(x_padded, params):
    x = _minmax(jnp.clip(x_padded, -7.0, 17.0), -7.0, 17.0, -1.0, 1.0)
    h = x[:, None, None, :]                            # NCHW (B, 1, 1, L)
    for i, ((_cin, _cout, _k, s, p), (w, b)) in enumerate(zip(STAGES, params)):
        h = jax.lax.conv_general_dilated(
            h, w, window_strides=(1, s), padding=((0, 0), (p, p)),
            dimension_numbers=("NCHW", "OIHW", "NCHW"))
        h = h + b[None, :, None, None]
        nrm = jnp.sqrt(jnp.sum(h * h, axis=1, keepdims=True))
        h = h / jnp.maximum(nrm, 1e-12)
        h = jnp.maximum(h, 0.0)
        if i == len(STAGES) - 1:
            h = jnp.max(h, axis=(2, 3), keepdims=True)
        else:
            B, C, H, W = h.shape
            wp = W // 2
            h = jnp.max(h[..., : 2 * wp].reshape(B, C, H, wp, 2), axis=-1)
    return h.reshape(-1, OUTPUT_DIM)


if __name__ == "__main__":
    key = jax.random.PRNGKey(0)
    k_param, k_x = jax.random.split(key)
    params = init_params(k_param)

    # (2, 16): single grid step, even widths.  (10, 23): odd conv width + batch
    # padding + two grid steps (exercises the multi-tile / strided-pool paths).
    for (B, L) in [(2, 16), (10, 23)]:
        x = jax.random.normal(jax.random.fold_in(k_x, L), (B, L), jnp.float32) * 8.0
        out = jax.block_until_ready(listflow_cnn_forward(x, params))
        ref = jax.block_until_ready(_reference_forward(x, params))
        assert out.shape == (B, OUTPUT_DIM), out.shape
        assert bool(jnp.all(jnp.isfinite(out)))
        err = float(jnp.max(jnp.abs(out - ref)))
        assert bool(jnp.allclose(out, ref, rtol=2e-2, atol=2e-2)), err
    print("KERNEL_OK")
</pallas_src>

<mosaic_0001>
module attributes {stable_mosaic.version = 11 : i64} {
  func.func @kernel(%arg0: i32, %arg1: memref<8x7xf32, #tpu.memory_space<vmem>>, %arg2: memref<7x32xf32, #tpu.memory_space<vmem>>, %arg3: memref<1x32xf32, #tpu.memory_space<vmem>>, %arg4: memref<32x64xf32, #tpu.memory_space<vmem>>, %arg5: memref<32x64xf32, #tpu.memory_space<vmem>>, %arg6: memref<1x64xf32, #tpu.memory_space<vmem>>, %arg7: memref<64x128xf32, #tpu.memory_space<vmem>>, %arg8: memref<64x128xf32, #tpu.memory_space<vmem>>, %arg9: memref<1x128xf32, #tpu.memory_space<vmem>>, %arg10: memref<2x128xf32, #tpu.memory_space<vmem>>, %arg11: memref<8x32xf32, #tpu.memory_space<vmem>>, %arg12: memref<6x64xf32, #tpu.memory_space<vmem>>) attributes {dimension_semantics = [#tpu.dimension_semantics<parallel>], iteration_bounds = array<i64: 1>, scalar_prefetch = 0 : i64, scratch_operands = 2 : i64, tpu.core_type = #tpu.core_type<tc>, window_params = [{transform_indices = @transform_0, window_bounds = array<i64: 8, 7>}, {pipeline_mode = #tpu.pipeline_mode<synchronous>, transform_indices = @transform_1, window_bounds = array<i64: 7, 32>}, {pipeline_mode = #tpu.pipeline_mode<synchronous>, transform_indices = @transform_2, window_bounds = array<i64: 1, 32>}, {pipeline_mode = #tpu.pipeline_mode<synchronous>, transform_indices = @transform_3, window_bounds = array<i64: 32, 64>}, {pipeline_mode = #tpu.pipeline_mode<synchronous>, transform_indices = @transform_4, window_bounds = array<i64: 32, 64>}, {pipeline_mode = #tpu.pipeline_mode<synchronous>, transform_indices = @transform_5, window_bounds = array<i64: 1, 64>}, {pipeline_mode = #tpu.pipeline_mode<synchronous>, transform_indices = @transform_6, window_bounds = array<i64: 64, 128>}, {pipeline_mode = #tpu.pipeline_mode<synchronous>, transform_indices = @transform_7, window_bounds = array<i64: 64, 128>}, {pipeline_mode = #tpu.pipeline_mode<synchronous>, transform_indices = @transform_8, window_bounds = array<i64: 1, 128>}, {transform_indices = @transform_9, window_bounds = array<i64: 2, 128>}]} {
    %c0 = arith.constant 0 : index
    %c0_0 = arith.constant 0 : index
    %0 = vector.load %arg1[%c0, %c0_0] : memref<8x7xf32, #tpu.memory_space<vmem>>, vector<8x7xf32>
    %cst = arith.constant -7.000000e+00 : f32
    %cst_1 = arith.constant 1.700000e+01 : f32
    %1 = vector.broadcast %cst : f32 to vector<8x7xf32>
    %2 = arith.maximumf %1, %0 : vector<8x7xf32>
    %3 = vector.broadcast %cst_1 : f32 to vector<8x7xf32>
    %4 = arith.minimumf %3, %2 : vector<8x7xf32>
    %cst_2 = arith.constant -7.000000e+00 : f32
    %5 = vector.broadcast %cst_2 : f32 to vector<8x7xf32>
    %6 = arith.subf %4, %5 : vector<8x7xf32>
    %cst_3 = arith.constant 2.400000e+01 : f32
    %7 = vector.broadcast %cst_3 : f32 to vector<8x7xf32>
    %8 = arith.divf %6, %7 : vector<8x7xf32>
    %cst_4 = arith.constant 2.000000e+00 : f32
    %9 = vector.broadcast %cst_4 : f32 to vector<8x7xf32>
    %10 = arith.mulf %8, %9 : vector<8x7xf32>
    %cst_5 = arith.constant -1.000000e+00 : f32
    %11 = vector.broadcast %cst_5 : f32 to vector<8x7xf32>
    %12 = arith.addf %10, %11 : vector<8x7xf32>
    %c0_6 = arith.constant 0 : index
    %c0_7 = arith.constant 0 : index
    %13 = vector.load %arg2[%c0_6, %c0_7] : memref<7x32xf32, #tpu.memory_space<vmem>>, vector<7x32xf32>
    %cst_8 = arith.constant dense<0.000000e+00> : vector<8x32xf32>
    %14 = tpu.matmul %12, %13, %cst_8 {dimension_numbers = #tpu.dot_dimension_numbers<[1], [0], [0], [1], [0, 0, 1, 1], [], []>} : vector<8x7xf32>, vector<7x32xf32>, vector<8x32xf32> -> vector<8x32xf32>
    %c0_9 = arith.constant 0 : index
    %c0_10 = arith.constant 0 : index
    %15 = vector.load %arg3[%c0_9, %c0_10] : memref<1x32xf32, #tpu.memory_space<vmem>>, vector<1x32xf32>
    %16 = vector.broadcast %15 : vector<1x32xf32> to vector<8x32xf32>
    %17 = arith.addf %14, %16 : vector<8x32xf32>
    %18 = arith.mulf %17, %17 : vector<8x32xf32>
    %cst_11 = arith.constant dense<0.000000e+00> : vector<8xf32>
    %19 = vector.multi_reduction <add>, %18, %cst_11 [1] : vector<8x32xf32> to vector<8xf32>
    %20 = vector.shape_cast %19 : vector<8xf32> to vector<8x1xf32>
    %cst_12 = arith.constant 1.000000e-24 : f32
    %21 = vector.broadcast %cst_12 : f32 to vector<8x1xf32>
    %22 = arith.maximumf %20, %21 : vector<8x1xf32>
    %23 = math.rsqrt %22 : vector<8x1xf32>
    %24 = vector.broadcast %23 : vector<8x1xf32> to vector<8x32xf32>
    %25 = arith.mulf %17, %24 : vector<8x32xf32>
    %cst_13 = arith.constant 0.000000e+00 : f32
    %26 = vector.broadcast %cst_13 : f32 to vector<8x32xf32>
    %27 = arith.maximumf %25, %26 : vector<8x32xf32>
    %c0_14 = arith.constant 0 : index
    %c0_15 = arith.constant 0 : index
    %28 = vector.load %arg11[%c0_14, %c0_15] : memref<8x32xf32, #tpu.memory_space<vmem>>, vector<8x32xf32>
    tpu.vector_store %arg11[%c0_14, %c0_15], %27 {strides = array<i32>} : memref<8x32xf32, #tpu.memory_space<vmem>>, vector<8x32xf32>,
    %cst_16 = arith.constant 0.000000e+00 : f32
    %29 = vector.broadcast %cst_16 : f32 to vector<1x32xf32>
    %c0_17 = arith.constant 0 : index
    %c0_18 = arith.constant 0 : index
    %30 = tpu.strided_load %arg11[%c0_17, %c0_18] {strides = array<i32: 2, 1>} : memref<8x32xf32, #tpu.memory_space<vmem>>, vector<2x32xf32>
    %c1 = arith.constant 1 : index
    %c0_19 = arith.constant 0 : index
    %31 = tpu.strided_load %arg11[%c1, %c0_19] {strides = array<i32: 2, 1>} : memref<8x32xf32, #tpu.memory_space<vmem>>, vector<2x32xf32>
    %32 = arith.maximumf %30, %31 : vector<2x32xf32>
    %33 = tpu.concatenate %29, %32 in 0 : vector<1x32xf32>, vector<2x32xf32> -> vector<3x32xf32>
    %34 = tpu.concatenate %32, %29 in 0 : vector<2x32xf32>, vector<1x32xf32> -> vector<3x32xf32>
    %c4 = arith.constant 4 : index
    %c0_20 = arith.constant 0 : index
    %35 = tpu.strided_load %arg11[%c4, %c0_20] {strides = array<i32: 2, 1>} : memref<8x32xf32, #tpu.memory_space<vmem>>, vector<2x32xf32>
    %c5 = arith.constant 5 : index
    %c0_21 = arith.constant 0 : index
    %36 = tpu.strided_load %arg11[%c5, %c0_21] {strides = array<i32: 2, 1>} : memref<8x32xf32, #tpu.memory_space<vmem>>, vector<2x32xf32>
    %37 = arith.maximumf %35, %36 : vector<2x32xf32>
    %38 = tpu.concatenate %29, %37 in 0 : vector<1x32xf32>, vector<2x32xf32> -> vector<3x32xf32>
    %39 = tpu.concatenate %37, %29 in 0 : vector<2x32xf32>, vector<1x32xf32> -> vector<3x32xf32>
    %40 = tpu.concatenate %33, %38 in 0 : vector<3x32xf32>, vector<3x32xf32> -> vector<6x32xf32>
    %41 = tpu.concatenate %34, %39 in 0 : vector<3x32xf32>, vector<3x32xf32> -> vector<6x32xf32>
    %c0_22 = arith.constant 0 : index
    %c0_23 = arith.constant 0 : index
    %42 = vector.load %arg4[%c0_22, %c0_23] : memref<32x64xf32, #tpu.memory_space<vmem>>, vector<32x64xf32>
    %cst_24 = arith.constant dense<0.000000e+00> : vector<6x64xf32>
    %43 = tpu.matmul %40, %42, %cst_24 {dimension_numbers = #tpu.dot_dimension_numbers<[1], [0], [0], [1], [0, 0, 1, 1], [], []>} : vector<6x32xf32>, vector<32x64xf32>, vector<6x64xf32> -> vector<6x64xf32>
    %c0_25 = arith.constant 0 : index
    %c0_26 = arith.constant 0 : index
    %44 = vector.load %arg5[%c0_25, %c0_26] : memref<32x64xf32, #tpu.memory_space<vmem>>, vector<32x64xf32>
    %cst_27 = arith.constant dense<0.000000e+00> : vector<6x64xf32>
    %45 = tpu.matmul %41, %44, %cst_27 {dimension_numbers = #tpu.dot_dimension_numbers<[1], [0], [0], [1], [0, 0, 1, 1], [], []>} : vector<6x32xf32>, vector<32x64xf32>, vector<6x64xf32> -> vector<6x64xf32>
    %46 = arith.addf %43, %45 : vector<6x64xf32>
    %c0_28 = arith.constant 0 : index
    %c0_29 = arith.constant 0 : index
    %47 = vector.load %arg6[%c0_28, %c0_29] : memref<1x64xf32, #tpu.memory_space<vmem>>, vector<1x64xf32>
    %48 = vector.broadcast %47 : vector<1x64xf32> to vector<6x64xf32>
    %49 = arith.addf %46, %48 : vector<6x64xf32>
    %50 = arith.mulf %49, %49 : vector<6x64xf32>
    %cst_30 = arith.constant dense<0.000000e+00> : vector<6xf32>
    %51 = vector.multi_reduction <add>, %50, %cst_30 [1] : vector<6x64xf32> to vector<6xf32>
    %52 = vector.shape_cast %51 : vector<6xf32> to vector<6x1xf32>
    %cst_31 = arith.constant 1.000000e-24 : f32
    %53 = vector.broadcast %cst_31 : f32 to vector<6x1xf32>
    %54 = arith.maximumf %52, %53 : vector<6x1xf32>
    %55 = math.rsqrt %54 : vector<6x1xf32>
    %56 = vector.broadcast %55 : vector<6x1xf32> to vector<6x64xf32>
    %57 = arith.mulf %49, %56 : vector<6x64xf32>
    %cst_32 = arith.constant 0.000000e+00 : f32
    %58 = vector.broadcast %cst_32 : f32 to vector<6x64xf32>
    %59 = arith.maximumf %57, %58 : vector<6x64xf32>
    %c0_33 = arith.constant 0 : index
    %c0_34 = arith.constant 0 : index
    %60 = vector.load %arg12[%c0_33, %c0_34] : memref<6x64xf32, #tpu.memory_space<vmem>>, vector<6x64xf32>
    tpu.vector_store %arg12[%c0_33, %c0_34], %59 {strides = array<i32>} : memref<6x64xf32, #tpu.memory_space<vmem>>, vector<6x64xf32>,
    %cst_35 = arith.constant 0.000000e+00 : f32
    %61 = vector.broadcast %cst_35 : f32 to vector<1x64xf32>
    %c0_36 = arith.constant 0 : index
    %c0_37 = arith.constant 0 : index
    %62 = tpu.strided_load %arg12[%c0_36, %c0_37] {strides = array<i32: 2, 1>} : memref<6x64xf32, #tpu.memory_space<vmem>>, vector<1x64xf32>
    %c1_38 = arith.constant 1 : index
    %c0_39 = arith.constant 0 : index
    %63 = tpu.strided_load %arg12[%c1_38, %c0_39] {strides = array<i32: 2, 1>} : memref<6x64xf32, #tpu.memory_space<vmem>>, vector<1x64xf32>
    %64 = arith.maximumf %62, %63 : vector<1x64xf32>
    %65 = tpu.concatenate %61, %64 in 0 : vector<1x64xf32>, vector<1x64xf32> -> vector<2x64xf32>
    %66 = tpu.concatenate %64, %61 in 0 : vector<1x64xf32>, vector<1x64xf32> -> vector<2x64xf32>
    %c3 = arith.constant 3 : index
    %c0_40 = arith.constant 0 : index
    %67 = tpu.strided_load %arg12[%c3, %c0_40] {strides = array<i32: 2, 1>} : memref<6x64xf32, #tpu.memory_space<vmem>>, vector<1x64xf32>
    %c4_41 = arith.constant 4 : index
    %c0_42 = arith.constant 0 : index
    %68 = tpu.strided_load %arg12[%c4_41, %c0_42] {strides = array<i32: 2, 1>} : memref<6x64xf32, #tpu.memory_space<vmem>>, vector<1x64xf32>
    %69 = arith.maximumf %67, %68 : vector<1x64xf32>
    %70 = tpu.concatenate %61, %69 in 0 : vector<1x64xf32>, vector<1x64xf32> -> vector<2x64xf32>
    %71 = tpu.concatenate %69, %61 in 0 : vector<1x64xf32>, vector<1x64xf32> -> vector<2x64xf32>
    %72 = tpu.concatenate %65, %70 in 0 : vector<2x64xf32>, vector<2x64xf32> -> vector<4x64xf32>
    %73 = tpu.concatenate %66, %71 in 0 : vector<2x64xf32>, vector<2x64xf32> -> vector<4x64xf32>
    %c0_43 = arith.constant 0 : index
    %c0_44 = arith.constant 0 : index
    %74 = vector.load %arg7[%c0_43, %c0_44] : memref<64x128xf32, #tpu.memory_space<vmem>>, vector<64x128xf32>
    %cst_45 = arith.constant dense<0.000000e+00> : vector<4x128xf32>
    %75 = tpu.matmul %72, %74, %cst_45 {dimension_numbers = #tpu.dot_dimension_numbers<[1], [0], [0], [1], [0, 0, 1, 1], [], []>} : vector<4x64xf32>, vector<64x128xf32>, vector<4x128xf32> -> vector<4x128xf32>
    %c0_46 = arith.constant 0 : index
    %c0_47 = arith.constant 0 : index
    %76 = vector.load %arg8[%c0_46, %c0_47] : memref<64x128xf32, #tpu.memory_space<vmem>>, vector<64x128xf32>
    %cst_48 = arith.constant dense<0.000000e+00> : vector<4x128xf32>
    %77 = tpu.matmul %73, %76, %cst_48 {dimension_numbers = #tpu.dot_dimension_numbers<[1], [0], [0], [1], [0, 0, 1, 1], [], []>} : vector<4x64xf32>, vector<64x128xf32>, vector<4x128xf32> -> vector<4x128xf32>
    %78 = arith.addf %75, %77 : vector<4x128xf32>
    %c0_49 = arith.constant 0 : index
    %c0_50 = arith.constant 0 : index
    %79 = vector.load %arg9[%c0_49, %c0_50] : memref<1x128xf32, #tpu.memory_space<vmem>>, vector<1x128xf32>
    %80 = vector.broadcast %79 : vector<1x128xf32> to vector<4x128xf32>
    %81 = arith.addf %78, %80 : vector<4x128xf32>
    %82 = arith.mulf %81, %81 : vector<4x128xf32>
    %cst_51 = arith.constant dense<0.000000e+00> : vector<4xf32>
    %83 = vector.multi_reduction <add>, %82, %cst_51 [1] : vector<4x128xf32> to vector<4xf32>
    %84 = vector.shape_cast %83 : vector<4xf32> to vector<4x1xf32>
    %cst_52 = arith.constant 1.000000e-24 : f32
    %85 = vector.broadcast %cst_52 : f32 to vector<4x1xf32>
    %86 = arith.maximumf %84, %85 : vector<4x1xf32>
    %87 = math.rsqrt %86 : vector<4x1xf32>
    %88 = vector.broadcast %87 : vector<4x1xf32> to vector<4x128xf32>
    %89 = arith.mulf %81, %88 : vector<4x128xf32>
    %cst_53 = arith.constant 0.000000e+00 : f32
    %90 = vector.broadcast %cst_53 : f32 to vector<4x128xf32>
    %91 = arith.maximumf %89, %90 : vector<4x128xf32>
    %92 = vector.extract_strided_slice %91 {offsets = [0, 0], sizes = [2, 128], strides = [1, 1]} : vector<4x128xf32> to vector<2x128xf32>
    %cst_54 = arith.constant dense<0xFF800000> : vector<128xf32>
    %93 = vector.multi_reduction <maximumf>, %92, %cst_54 [0] : vector<2x128xf32> to vector<128xf32>
    %94 = vector.shape_cast %93 : vector<128xf32> to vector<1x128xf32>
    %95 = vector.extract_strided_slice %91 {offsets = [2, 0], sizes = [2, 128], strides = [1, 1]} : vector<4x128xf32> to vector<2x128xf32>
    %cst_55 = arith.constant dense<0xFF800000> : vector<128xf32>
    %96 = vector.multi_reduction <maximumf>, %95, %cst_55 [0] : vector<2x128xf32> to vector<128xf32>
    %97 = vector.shape_cast %96 : vector<128xf32> to vector<1x128xf32>
    %98 = tpu.concatenate %94, %97 in 0 : vector<1x128xf32>, vector<1x128xf32> -> vector<2x128xf32>
    %c0_56 = arith.constant 0 : index
    %c0_57 = arith.constant 0 : index
    %99 = vector.load %arg10[%c0_56, %c0_57] : memref<2x128xf32, #tpu.memory_space<vmem>>, vector<2x128xf32>
    tpu.vector_store %arg10[%c0_56, %c0_57], %98 {strides = array<i32>} : memref<2x128xf32, #tpu.memory_space<vmem>>, vector<2x128xf32>,
    return
  }
  func.func @transform_0(%arg0: i32) -> (i32, i32) {
    %c0_i32 = arith.constant 0 : i32
    %c0_i32_0 = arith.constant 0 : i32
    return %arg0, %c0_i32 : i32, i32
  }
  func.func @transform_1(%arg0: i32) -> (i32, i32) {
    %c0_i32 = arith.constant 0 : i32
    %c0_i32_0 = arith.constant 0 : i32
    %c0_i32_1 = arith.constant 0 : i32
    return %c0_i32, %c0_i32_0 : i32, i32
  }
  func.func @transform_2(%arg0: i32) -> (i32, i32) {
    %c0_i32 = arith.constant 0 : i32
    %c0_i32_0 = arith.constant 0 : i32
    %c0_i32_1 = arith.constant 0 : i32
    return %c0_i32, %c0_i32_0 : i32, i32
  }
  func.func @transform_3(%arg0: i32) -> (i32, i32) {
    %c0_i32 = arith.constant 0 : i32
    %c0_i32_0 = arith.constant 0 : i32
    %c0_i32_1 = arith.constant 0 : i32
    return %c0_i32, %c0_i32_0 : i32, i32
  }
  func.func @transform_4(%arg0: i32) -> (i32, i32) {
    %c0_i32 = arith.constant 0 : i32
    %c0_i32_0 = arith.constant 0 : i32
    %c0_i32_1 = arith.constant 0 : i32
    return %c0_i32, %c0_i32_0 : i32, i32
  }
  func.func @transform_5(%arg0: i32) -> (i32, i32) {
    %c0_i32 = arith.constant 0 : i32
    %c0_i32_0 = arith.constant 0 : i32
    %c0_i32_1 = arith.constant 0 : i32
    return %c0_i32, %c0_i32_0 : i32, i32
  }
  func.func @transform_6(%arg0: i32) -> (i32, i32) {
    %c0_i32 = arith.constant 0 : i32
    %c0_i32_0 = arith.constant 0 : i32
    %c0_i32_1 = arith.constant 0 : i32
    return %c0_i32, %c0_i32_0 : i32, i32
  }
  func.func @transform_7(%arg0: i32) -> (i32, i32) {
    %c0_i32 = arith.constant 0 : i32
    %c0_i32_0 = arith.constant 0 : i32
    %c0_i32_1 = arith.constant 0 : i32
    return %c0_i32, %c0_i32_0 : i32, i32
  }
  func.func @transform_8(%arg0: i32) -> (i32, i32) {
    %c0_i32 = arith.constant 0 : i32
    %c0_i32_0 = arith.constant 0 : i32
    %c0_i32_1 = arith.constant 0 : i32
    return %c0_i32, %c0_i32_0 : i32, i32
  }
  func.func @transform_9(%arg0: i32) -> (i32, i32) {
    %c0_i32 = arith.constant 0 : i32
    %c0_i32_0 = arith.constant 0 : i32
    return %arg0, %c0_i32 : i32, i32
  }
}

</mosaic_0001>

<llo_original>
// kernel: tpu_custom_call.1
$region0: #{tpu_custom_call.1}
  #allocation0 [shape = 'u32[]', space=smem, size = 0x4, offset = 0x4, fixed_abs, tag = 'smem constant byte address 0x4 - core index']
  #allocation1 [shape = 'u32[144,128]{1,0:T(1,128)}', space=vmem, size = 0x12000, scoped, tag = 'internal scratch']
  #allocation2 [shape = 'f32[8,32]{1,0:T(8,128)}', space=vmem, size = 0x1000, scoped, tag = 'scratch operand']
  #allocation3 [shape = 'f32[6,64]{1,0:T(8,128)}', space=vmem, size = 0x1000, scoped, tag = 'scratch operand']
  %s0 = inlined_call_operand.hbm [shape: f32[8,7], index: 0, kind: input, shape index: {}]
  %s1 = inlined_call_operand.hbm [shape: f32[7,32], index: 1, kind: input, shape index: {}]
  %s2 = inlined_call_operand.vmem [shape: f32[1,32], index: 2, kind: input, shape index: {}]
  %s3 = inlined_call_operand.hbm [shape: f32[32,64], index: 3, kind: input, shape index: {}]
  %s4 = inlined_call_operand.hbm [shape: f32[32,64], index: 4, kind: input, shape index: {}]
  %s5 = inlined_call_operand.vmem [shape: f32[1,64], index: 5, kind: input, shape index: {}]
  %s6 = inlined_call_operand.hbm [shape: f32[64,128], index: 6, kind: input, shape index: {}]
  %s7 = inlined_call_operand.hbm [shape: f32[64,128], index: 7, kind: input, shape index: {}]
  %s8 = inlined_call_operand.vmem [shape: f32[1,128], index: 8, kind: input, shape index: {}]
  %s9 = inlined_call_operand.hbm [shape: f32[2,128], index: 9, kind: output, shape index: {}]
  %s10 = sld [smem:[#allocation0]]
  $region70: #{tpu_custom_call.1} parent=0
    _
  %s12 = ssub.s32 1, %s10
  %s13 = scalar_select 0, %s12, %s10
  $region1: #{tpu_custom_call.1} parent=0
    #allocation4 [shape = 'u8[4096]{0}', space=vmem, size = 0x1000, scoped, tag = 'input window, operand 0, single buffered']
    #allocation5 [shape = 's32[1]{0}', space=sflag, size = 0x4, scoped, tag = 'scoped memory for tpu_custom_call.1']
    #allocation6 [shape = 's32[1]{0}', space=sflag, size = 0x4, scoped, tag = 'scoped memory for tpu_custom_call.1']
    #allocation7 [shape = 'u8[4096]{0}', space=vmem, size = 0x1000, scoped, tag = 'input window, operand 1, single buffered']
    #allocation8 [shape = 's32[1]{0}', space=sflag, size = 0x4, scoped, tag = 'scoped memory for tpu_custom_call.1']
    #allocation9 [shape = 'u8[16384]{0}', space=vmem, size = 0x4000, scoped, tag = 'input window, operand 3, single buffered']
    #allocation10 [shape = 'u8[16384]{0}', space=vmem, size = 0x4000, scoped, tag = 'input window, operand 4, single buffered']
    #allocation11 [shape = 's32[1]{0}', space=sflag, size = 0x4, scoped, tag = 'scoped memory for tpu_custom_call.1']
    #allocation12 [shape = 'u8[32768]{0}', space=vmem, size = 0x8000, scoped, tag = 'input window, operand 6, single buffered']
    #allocation13 [shape = 'u8[32768]{0}', space=vmem, size = 0x8000, scoped, tag = 'input window, operand 7, single buffered']
    #allocation14 [shape = 's32[1]{0}', space=sflag, size = 0x4, scoped, tag = 'scoped memory for tpu_custom_call.1']
    #allocation15 [shape = 'u8[1024]{0}', space=vmem, size = 0x400, scoped, tag = 'output window, operand 0, single buffered']
    %14 = vsyncpa [#allocation5], 0
    %15 = vsyncpa [#allocation8], 0
    %16 = vsyncpa [#allocation11], 0
    %17 = vsyncpa [#allocation14], 0
    %18 = vsyncpa [#allocation6], 0
    // Predicated region
    $region2: #{tpu_custom_call.1} parent=1 // pred_check
      _
    $region3: #{tpu_custom_call.1} parent=1 // pred_check_branch
      %20 = sbr.rel (0) target = $region5
    $region4: #{tpu_custom_call.1} parent=1 // pred_region
      %s22 = ssub.s32 128, 128
      %23 = vsyncadd [#allocation5], %s22
      %s25 = sshll.u32 [#allocation4], 4
      %s26 = int_to_ptr.vmem [resolvable:$true] %s25
      %28 = dma.hbm_to_vmem [thread:$0]  %s0, 128, %s26, [#allocation5]
    $region5: #{tpu_custom_call.1} parent=1 // pred_fallthru
      _
    // Predicated region
    $region6: #{tpu_custom_call.1} parent=1 // pred_check
      _
    $region7: #{tpu_custom_call.1} parent=1 // pred_check_branch
      %30 = sbr.rel (0) target = $region9
    $region8: #{tpu_custom_call.1} parent=1 // pred_region
      %s32 = ssub.s32 128, 128
      %33 = vsyncadd [#allocation8], %s32
      %s35 = sshll.u32 [#allocation7], 4
      %s36 = int_to_ptr.vmem [resolvable:$true] %s35
      %38 = dma.hbm_to_vmem [thread:$0]  %s1, 128, %s36, [#allocation8]
    $region9: #{tpu_custom_call.1} parent=1 // pred_fallthru
      _
    // Predicated region
    $region10: #{tpu_custom_call.1} parent=1 // pred_check
      _
    $region11: #{tpu_custom_call.1} parent=1 // pred_check_branch
      %40 = sbr.rel (0) target = $region13
    $region12: #{tpu_custom_call.1} parent=1 // pred_region
      _
    $region13: #{tpu_custom_call.1} parent=1 // pred_fallthru
      _
    // Predicated region
    $region14: #{tpu_custom_call.1} parent=1 // pred_check
      _
    $region15: #{tpu_custom_call.1} parent=1 // pred_check_branch
      %42 = sbr.rel (0) target = $region17
    $region16: #{tpu_custom_call.1} parent=1 // pred_region
      %s44 = ssub.s32 512, 512
      %45 = vsyncadd [#allocation8], %s44
      %s46 = sshll.u32 [#allocation9], 4
      %s47 = int_to_ptr.vmem [resolvable:$true] %s46
      %52 = dma.hbm_to_vmem [thread:$0]  %s3, 512, %s47, [#allocation8], 128, 128, 8
    $region17: #{tpu_custom_call.1} parent=1 // pred_fallthru
      _
    // Predicated region
    $region18: #{tpu_custom_call.1} parent=1 // pred_check
      _
    $region19: #{tpu_custom_call.1} parent=1 // pred_check_branch
      %54 = sbr.rel (0) target = $region21
    $region20: #{tpu_custom_call.1} parent=1 // pred_region
      %s56 = ssub.s32 512, 512
      %57 = vsyncadd [#allocation11], %s56
      %s58 = sshll.u32 [#allocation10], 4
      %s59 = int_to_ptr.vmem [resolvable:$true] %s58
      %64 = dma.hbm_to_vmem [thread:$0]  %s4, 512, %s59, [#allocation11], 128, 128, 8
    $region21: #{tpu_custom_call.1} parent=1 // pred_fallthru
      _
    // Predicated region
    $region22: #{tpu_custom_call.1} parent=1 // pred_check
      _
    $region23: #{tpu_custom_call.1} parent=1 // pred_check_branch
      %66 = sbr.rel (0) target = $region25
    $region24: #{tpu_custom_call.1} parent=1 // pred_region
      _
    $region25: #{tpu_custom_call.1} parent=1 // pred_fallthru
      _
    // Predicated region
    $region26: #{tpu_custom_call.1} parent=1 // pred_check
      _
    $region27: #{tpu_custom_call.1} parent=1 // pred_check_branch
      %68 = sbr.rel (0) target = $region29
    $region28: #{tpu_custom_call.1} parent=1 // pred_region
      %s70 = ssub.s32 1024, 1024
      %71 = vsyncadd [#allocation11], %s70
      %s72 = sshll.u32 [#allocation12], 4
      %s73 = int_to_ptr.vmem [resolvable:$true] %s72
      %78 = dma.hbm_to_vmem [thread:$0]  %s6, 1024, %s73, [#allocation11], 128, 128, 8
    $region29: #{tpu_custom_call.1} parent=1 // pred_fallthru
      _
    // Predicated region
    $region30: #{tpu_custom_call.1} parent=1 // pred_check
      _
    $region31: #{tpu_custom_call.1} parent=1 // pred_check_branch
      %80 = sbr.rel (0) target = $region33
    $region32: #{tpu_custom_call.1} parent=1 // pred_region
      %s82 = ssub.s32 1024, 1024
      %83 = vsyncadd [#allocation14], %s82
      %s84 = sshll.u32 [#allocation13], 4
      %s85 = int_to_ptr.vmem [resolvable:$true] %s84
      %90 = dma.hbm_to_vmem [thread:$0]  %s7, 1024, %s85, [#allocation14], 128, 128, 8
    $region33: #{tpu_custom_call.1} parent=1 // pred_fallthru
      _
    // Predicated region
    $region34: #{tpu_custom_call.1} parent=1 // pred_check
      _
    $region35: #{tpu_custom_call.1} parent=1 // pred_check_branch
      %92 = sbr.rel (0) target = $region37
    $region36: #{tpu_custom_call.1} parent=1 // pred_region
      _
    $region37: #{tpu_custom_call.1} parent=1 // pred_fallthru
      _
    // Predicated region
    $region38: #{tpu_custom_call.1} parent=1 // pred_check
      _
    $region39: #{tpu_custom_call.1} parent=1 // pred_check_branch
      %94 = sbr.rel (0) target = $region41
    $region40: #{tpu_custom_call.1} parent=1 // pred_region
      %95 = dma.done [#allocation5], 128
    $region41: #{tpu_custom_call.1} parent=1 // pred_fallthru
      _
    // Predicated region
    $region42: #{tpu_custom_call.1} parent=1 // pred_check
      _
    $region43: #{tpu_custom_call.1} parent=1 // pred_check_branch
      %97 = sbr.rel (0) target = $region45
    $region44: #{tpu_custom_call.1} parent=1 // pred_region
      %98 = dma.done [#allocation8], 128
    $region45: #{tpu_custom_call.1} parent=1 // pred_fallthru
      _
    // Predicated region
    $region46: #{tpu_custom_call.1} parent=1 // pred_check
      _
    $region47: #{tpu_custom_call.1} parent=1 // pred_check_branch
      %100 = sbr.rel (0) target = $region49
    $region48: #{tpu_custom_call.1} parent=1 // pred_region
      %101 = dma.done [#allocation8], 512
    $region49: #{tpu_custom_call.1} parent=1 // pred_fallthru
      _
    // Predicated region
    $region50: #{tpu_custom_call.1} parent=1 // pred_check
      _
    $region51: #{tpu_custom_call.1} parent=1 // pred_check_branch
      %103 = sbr.rel (0) target = $region53
    $region52: #{tpu_custom_call.1} parent=1 // pred_region
      %104 = dma.done [#allocation11], 512
    $region53: #{tpu_custom_call.1} parent=1 // pred_fallthru
      _
    // Predicated region
    $region54: #{tpu_custom_call.1} parent=1 // pred_check
      _
    $region55: #{tpu_custom_call.1} parent=1 // pred_check_branch
      %106 = sbr.rel (0) target = $region57
    $region56: #{tpu_custom_call.1} parent=1 // pred_region
      %107 = dma.done [#allocation11], 1024
    $region57: #{tpu_custom_call.1} parent=1 // pred_fallthru
      _
    // Predicated region
    $region58: #{tpu_custom_call.1} parent=1 // pred_check
      _
    $region59: #{tpu_custom_call.1} parent=1 // pred_check_branch
      %109 = sbr.rel (0) target = $region61
    $region60: #{tpu_custom_call.1} parent=1 // pred_region
      %110 = dma.done [#allocation14], 1024
    $region61: #{tpu_custom_call.1} parent=1 // pred_fallthru
      _
    %v111 = vld [vmem:[#allocation4] sm:$0xff]
    %v112 = vmax.f32 %v111, -7.0
    %v113 = vmin.f32 %v112, 17.0
    %v114 = vsub.f32 %v113, -7.0
    %v115 = vrcp.pop 24.0
    %v116 = vmul.f32 %v114, %v115
    %v117 = vmul.f32 %v116, 2.0
    %v118 = vadd.f32 %v117, -1.0
    %v119 = vld [vmem:[#allocation7] sm:$0x7f]
    %v120 = vld [vmem:[%s2] sm:$0x1]
    %v122 = vlaneseq
    %v123 = vshrl.u32 %v122, 7
    %v124 = vsub.s32 0, %v123
    %v125 = vrot.slane %v120, %v124
    %vm127 = vcmask 56320
    %v129 = vsel %vm127, %v118, 0
    %vm131 = vcmask 1046528
    %v133 = vsel %vm131, %v119, 0
    %135 = vmatprep.subr.mxu0 0.0
    %136 = vmatpush1.msra.mxu0 %v133
    %137 = vmatprep.subr.mxu0 0.0
    %138 = vmatpush1.msra.mxu0 0.0
    %139 = vmatprep.subr.mxu0 0.0
    %140 = vmatpush1.msra.mxu0 0.0
    %141 = vmatprep.subr.mxu0 0.0
    %142 = vmatpush1.msra.mxu0 0.0
    %143 = vmatprep.subr.mxu0 0.0
    %144 = vmatpush1.msra.mxu0 0.0
    %145 = vmatprep.subr.mxu0 0.0
    %146 = vmatpush1.msra.mxu0 0.0
    %147 = vmatprep.subr.mxu0 0.0
    %148 = vmatpush1.msra.mxu0 0.0
    %149 = vmatprep.subr.mxu0 0.0
    %150 = vmatpush1.msra.mxu0 0.0
    %151 = vmatprep.subr.mxu0 0.0
    %152 = vmatpush1.msra.mxu0 0.0
    %153 = vmatprep.subr.mxu0 0.0
    %154 = vmatpush1.msra.mxu0 0.0
    %155 = vmatprep.subr.mxu0 0.0
    %156 = vmatpush1.msra.mxu0 0.0
    %157 = vmatprep.subr.mxu0 0.0
    %158 = vmatpush1.msra.mxu0 0.0
    %159 = vmatprep.subr.mxu0 0.0
    %160 = vmatpush1.msra.mxu0 0.0
    %161 = vmatprep.subr.mxu0 0.0
    %162 = vmatpush1.msra.mxu0 0.0
    %163 = vmatprep.subr.mxu0 0.0
    %164 = vmatpush1.msra.mxu0 0.0
    %165 = vmatprep.subr.mxu0 0.0
    %166 = vmatpush1.msra.mxu0 0.0
    %167 = vmatprep.subr.mxu0 0.0
    %168 = vmatpush1.msra.mxu0 0.0
    %169 = vmatprep.subr.mxu0 0.0
    %170 = vmatpush1.msra.mxu0 0.0
    %171 = vmatprep.subr.mxu0 0.0
    %172 = vmatpush1.msra.mxu0 0.0
    %173 = vmatprep.subr.mxu0 0.0
    %174 = vmatpush1.msra.mxu0 0.0
    %175 = vmatprep.subr.mxu0 0.0
    %176 = vmatpush1.msra.mxu0 0.0
    %177 = vmatprep.subr.mxu0 0.0
    %178 = vmatpush1.msra.mxu0 0.0
    %179 = vmatprep.subr.mxu0 0.0
    %180 = vmatpush1.msra.mxu0 0.0
    %181 = vmatprep.subr.mxu0 0.0
    %182 = vmatpush1.msra.mxu0 0.0
    %183 = vmatprep.subr.mxu0 0.0
    %184 = vmatpush1.msra.mxu0 0.0
    %185 = vmatprep.subr.mxu0 0.0
    %186 = vmatpush1.msra.mxu0 0.0
    %187 = vmatprep.subr.mxu0 0.0
    %188 = vmatpush1.msra.mxu0 0.0
    %189 = vmatprep.subr.mxu0 0.0
    %190 = vmatpush1.msra.mxu0 0.0
    %191 = vmatprep.subr.mxu0 0.0
    %192 = vmatpush1.msra.mxu0 0.0
    %193 = vmatprep.subr.mxu0 0.0
    %194 = vmatpush1.msra.mxu0 0.0
    %195 = vmatprep.subr.mxu0 0.0
    %196 = vmatpush1.msra.mxu0 0.0
    %197 = vmatprep.subr.mxu0 0.0
    %198 = vmatpush1.msra.mxu0 0.0
    %199 = vmatprep.mubr.f32.mxu0 0.0
    %200 = vmatmul.mubr.f32.gmra.mrb[0].mxu0 %v129
    %v201 = vpop.f32.mrb[0].mxu0
    %v202 = vadd.f32 %v125, %v201
    %v203 = vpop.f32.mrb[0].mxu0
    %204 = vdwg.mxu0
    %v205 = vmul.f32 %v202, %v202
    %vm206 = vcmask 261120
    %v207 = vsel %vm206, %v205, 0.0
    %208 = vadd.xlane.f32.xlu0 %v207
    %v209 = vpop.xlane.xlu0 %208
    %v210 = vmax.f32 %v209, 1e-24
    %v211 = vrsqrt.pop %v210
    %v212 = vmul.f32 %v202, %v211
    %v213 = vmax.f32 %v212, 0.0
    %214 = vst.msk [vmem:[#allocation2] sm:$0xff] %vm206, %v213
    %v215 = vld [vmem:[#allocation2] ss:$2 sm:$0x3]
    %s216 = scalar_lea.vmem [#allocation2], 1
    %v217 = vld [vmem:[%s216] ss:$2 sm:$0x3]
    %v218 = vmax.f32 %v215, %v217
    %v220 = vrot.slane %v218, 7
    %vm222 = vcmask 1040384
    %v223 = vsel %vm222, 0.0, %v220
    %vm224 = vcmask 1041408
    %v225 = vsel %vm224, %v218, 0.0
    %s226 = scalar_lea.vmem [#allocation2], 4
    %v227 = vld [vmem:[%s226] ss:$2 sm:$0x3]
    %s228 = scalar_lea.vmem [#allocation2], 5
    %v229 = vld [vmem:[%s228] ss:$2 sm:$0x3]
    %v230 = vmax.f32 %v227, %v229
    %v232 = vrot.slane %v230, 7
    %v234 = vsel %vm222, 0.0, %v232
    %v235 = vsel %vm224, %v230, 0.0
    %v237 = vrot.slane %v234, 5
    %vm239 = vcmask 1042432
    %v240 = vsel %vm239, %v223, %v237
    %v242 = vrot.slane %v235, 5
    %v244 = vsel %vm239, %v225, %v242
    %v245 = vld [vmem:[#allocation9] sm:$0xff]
    %v246 = vld [vmem:[#allocation9 + $0x8] sm:$0xff]
    %v247 = vld [vmem:[#allocation9 + $0x10] sm:$0xff]
    %v248 = vld [vmem:[#allocation9 + $0x18] sm:$0xff]
    %v249 = vld [vmem:[#allocation10] sm:$0xff]
    %v250 = vld [vmem:[#allocation10 + $0x8] sm:$0xff]
    %v251 = vld [vmem:[#allocation10 + $0x10] sm:$0xff]
    %v252 = vld [vmem:[#allocation10 + $0x18] sm:$0xff]
    %v254 = vsel %vm206, %v244, 0
    %256 = vmatprep.subr.mxu0 0.0
    %257 = vmatpush1.msra.mxu0 %v249
    %258 = vmatprep.subr.mxu0 0.0
    %259 = vmatpush1.msra.mxu0 %v250
    %260 = vmatprep.subr.mxu0 0.0
    %261 = vmatpush1.msra.mxu0 %v251
    %262 = vmatprep.subr.mxu0 0.0
    %263 = vmatpush1.msra.mxu0 %v252
    %264 = vmatprep.subr.mxu0 0.0
    %265 = vmatpush1.msra.mxu0 0.0
    %266 = vmatprep.subr.mxu0 0.0
    %267 = vmatpush1.msra.mxu0 0.0
    %268 = vmatprep.subr.mxu0 0.0
    %269 = vmatpush1.msra.mxu0 0.0
    %270 = vmatprep.subr.mxu0 0.0
    %271 = vmatpush1.msra.mxu0 0.0
    %272 = vmatprep.subr.mxu0 0.0
    %273 = vmatpush1.msra.mxu0 0.0
    %274 = vmatprep.subr.mxu0 0.0
    %275 = vmatpush1.msra.mxu0 0.0
    %276 = vmatprep.subr.mxu0 0.0
    %277 = vmatpush1.msra.mxu0 0.0
    %278 = vmatprep.subr.mxu0 0.0
    %279 = vmatpush1.msra.mxu0 0.0
    %280 = vmatprep.subr.mxu0 0.0
    %281 = vmatpush1.msra.mxu0 0.0
    %282 = vmatprep.subr.mxu0 0.0
    %283 = vmatpush1.msra.mxu0 0.0
    %284 = vmatprep.subr.mxu0 0.0
    %285 = vmatpush1.msra.mxu0 0.0
    %286 = vmatprep.subr.mxu0 0.0
    %287 = vmatpush1.msra.mxu0 0.0
    %288 = vmatprep.subr.mxu0 0.0
    %289 = vmatpush1.msra.mxu0 0.0
    %290 = vmatprep.subr.mxu0 0.0
    %291 = vmatpush1.msra.mxu0 0.0
    %292 = vmatprep.subr.mxu0 0.0
    %293 = vmatpush1.msra.mxu0 0.0
    %294 = vmatprep.subr.mxu0 0.0
    %295 = vmatpush1.msra.mxu0 0.0
    %296 = vmatprep.subr.mxu0 0.0
    %297 = vmatpush1.msra.mxu0 0.0
    %298 = vmatprep.subr.mxu0 0.0
    %299 = vmatpush1.msra.mxu0 0.0
    %300 = vmatprep.subr.mxu0 0.0
    %301 = vmatpush1.msra.mxu0 0.0
    %302 = vmatprep.subr.mxu0 0.0
    %303 = vmatpush1.msra.mxu0 0.0
    %304 = vmatprep.subr.mxu0 0.0
    %305 = vmatpush1.msra.mxu0 0.0
    %306 = vmatprep.subr.mxu0 0.0
    %307 = vmatpush1.msra.mxu0 0.0
    %308 = vmatprep.subr.mxu0 0.0
    %309 = vmatpush1.msra.mxu0 0.0
    %310 = vmatprep.subr.mxu0 0.0
    %311 = vmatpush1.msra.mxu0 0.0
    %312 = vmatprep.subr.mxu0 0.0
    %313 = vmatpush1.msra.mxu0 0.0
    %314 = vmatprep.subr.mxu0 0.0
    %315 = vmatpush1.msra.mxu0 0.0
    %316 = vmatprep.subr.mxu0 0.0
    %317 = vmatpush1.msra.mxu0 0.0
    %318 = vmatprep.subr.mxu0 0.0
    %319 = vmatpush1.msra.mxu0 0.0
    %320 = vmatprep.mubr.f32.mxu0 0.0
    %321 = vmatmul.mubr.f32.gmra.mrb[0].mxu0 %v254
    %v322 = vpop.f32.mrb[0].mxu0
    %v323 = vadd.f32 0.0, %v322
    %v324 = vpop.f32.mrb[0].mxu0
    %325 = vdwg.mxu0
    %v327 = vsel %vm206, %v240, 0
    %329 = vmatprep.subr.mxu0 0.0
    %330 = vmatpush1.msra.mxu0 %v245
    %331 = vmatprep.subr.mxu0 0.0
    %332 = vmatpush1.msra.mxu0 %v246
    %333 = vmatprep.subr.mxu0 0.0
    %334 = vmatpush1.msra.mxu0 %v247
    %335 = vmatprep.subr.mxu0 0.0
    %336 = vmatpush1.msra.mxu0 %v248
    %337 = vmatprep.subr.mxu0 0.0
    %338 = vmatpush1.msra.mxu0 0.0
    %339 = vmatprep.subr.mxu0 0.0
    %340 = vmatpush1.msra.mxu0 0.0
    %341 = vmatprep.subr.mxu0 0.0
    %342 = vmatpush1.msra.mxu0 0.0
    %343 = vmatprep.subr.mxu0 0.0
    %344 = vmatpush1.msra.mxu0 0.0
    %345 = vmatprep.subr.mxu0 0.0
    %346 = vmatpush1.msra.mxu0 0.0
    %347 = vmatprep.subr.mxu0 0.0
    %348 = vmatpush1.msra.mxu0 0.0
    %349 = vmatprep.subr.mxu0 0.0
    %350 = vmatpush1.msra.mxu0 0.0
    %351 = vmatprep.subr.mxu0 0.0
    %352 = vmatpush1.msra.mxu0 0.0
    %353 = vmatprep.subr.mxu0 0.0
    %354 = vmatpush1.msra.mxu0 0.0
    %355 = vmatprep.subr.mxu0 0.0
    %356 = vmatpush1.msra.mxu0 0.0
    %357 = vmatprep.subr.mxu0 0.0
    %358 = vmatpush1.msra.mxu0 0.0
    %359 = vmatprep.subr.mxu0 0.0
    %360 = vmatpush1.msra.mxu0 0.0
    %361 = vmatprep.subr.mxu0 0.0
    %362 = vmatpush1.msra.mxu0 0.0
    %363 = vmatprep.subr.mxu0 0.0
    %364 = vmatpush1.msra.mxu0 0.0
    %365 = vmatprep.subr.mxu0 0.0
    %366 = vmatpush1.msra.mxu0 0.0
    %367 = vmatprep.subr.mxu0 0.0
    %368 = vmatpush1.msra.mxu0 0.0
    %369 = vmatprep.subr.mxu0 0.0
    %370 = vmatpush1.msra.mxu0 0.0
    %371 = vmatprep.subr.mxu0 0.0
    %372 = vmatpush1.msra.mxu0 0.0
    %373 = vmatprep.subr.mxu0 0.0
    %374 = vmatpush1.msra.mxu0 0.0
    %375 = vmatprep.subr.mxu0 0.0
    %376 = vmatpush1.msra.mxu0 0.0
    %377 = vmatprep.subr.mxu0 0.0
    %378 = vmatpush1.msra.mxu0 0.0
    %379 = vmatprep.subr.mxu0 0.0
    %380 = vmatpush1.msra.mxu0 0.0
    %381 = vmatprep.subr.mxu0 0.0
    %382 = vmatpush1.msra.mxu0 0.0
    %383 = vmatprep.subr.mxu0 0.0
    %384 = vmatpush1.msra.mxu0 0.0
    %385 = vmatprep.subr.mxu0 0.0
    %386 = vmatpush1.msra.mxu0 0.0
    %387 = vmatprep.subr.mxu0 0.0
    %388 = vmatpush1.msra.mxu0 0.0
    %389 = vmatprep.subr.mxu0 0.0
    %390 = vmatpush1.msra.mxu0 0.0
    %391 = vmatprep.subr.mxu0 0.0
    %392 = vmatpush1.msra.mxu0 0.0
    %393 = vmatprep.mubr.f32.mxu0 0.0
    %394 = vmatmul.mubr.f32.gmra.mrb[0].mxu0 %v327
    %v395 = vpop.f32.mrb[0].mxu0
    %v396 = vadd.f32 %v323, %v395
    %v397 = vpop.f32.mrb[0].mxu0
    %398 = vdwg.mxu0
    %v399 = vld [vmem:[%s5] sm:$0x1]
    %v401 = vlaneseq
    %v402 = vshrl.u32 %v401, 7
    %v403 = vsub.s32 0, %v402
    %v404 = vrot.slane %v399, %v403
    %v406 = vadd.f32 %v396, %v404
    %v407 = vmul.f32 %v406, %v406
    %vm408 = vcmask 521216
    %v409 = vsel %vm408, %v407, 0.0
    %410 = vadd.xlane.f32.xlu0 %v409
    %v411 = vpop.xlane.xlu0 %410
    %v412 = vmax.f32 %v411, 1e-24
    %v413 = vrsqrt.pop %v412
    %v414 = vmul.f32 %v406, %v413
    %v415 = vmax.f32 %v414, 0.0
    %416 = vst.msk [vmem:[#allocation3] sm:$0x3f] %vm408, %v415
    %v417 = vld [vmem:[#allocation3] ss:$2 sm:$0x1]
    %s418 = scalar_lea.vmem [#allocation3], 1
    %v419 = vld [vmem:[%s418] ss:$2 sm:$0x1]
    %v420 = vmax.f32 %v417, %v419
    %v422 = vrot.slane %v420, 7
    %v424 = vsel %vm222, 0.0, %v422
    %v425 = vsel %vm222, %v420, 0.0
    %s426 = scalar_lea.vmem [#allocation3], 3
    %v427 = vld [vmem:[%s426] ss:$2 sm:$0x1]
    %s428 = scalar_lea.vmem [#allocation3], 4
    %v429 = vld [vmem:[%s428] ss:$2 sm:$0x1]
    %v430 = vmax.f32 %v427, %v429
    %v432 = vrot.slane %v430, 7
    %v434 = vsel %vm222, 0.0, %v432
    %v435 = vsel %vm222, %v430, 0.0
    %v437 = vrot.slane %v434, 6
    %v439 = vsel %vm224, %v424, %v437
    %v441 = vrot.slane %v435, 6
    %v443 = vsel %vm224, %v425, %v441
    %v444 = vld [vmem:[#allocation12] sm:$0xff]
    %v445 = vld [vmem:[#allocation12 + $0x8] sm:$0xff]
    %v446 = vld [vmem:[#allocation12 + $0x10] sm:$0xff]
    %v447 = vld [vmem:[#allocation12 + $0x18] sm:$0xff]
    %v448 = vld [vmem:[#allocation12 + $0x20] sm:$0xff]
    %v449 = vld [vmem:[#allocation12 + $0x28] sm:$0xff]
    %v450 = vld [vmem:[#allocation12 + $0x30] sm:$0xff]
    %v451 = vld [vmem:[#allocation12 + $0x38] sm:$0xff]
    %v452 = vld [vmem:[#allocation13] sm:$0xff]
    %v453 = vld [vmem:[#allocation13 + $0x8] sm:$0xff]
    %v454 = vld [vmem:[#allocation13 + $0x10] sm:$0xff]
    %v455 = vld [vmem:[#allocation13 + $0x18] sm:$0xff]
    %v456 = vld [vmem:[#allocation13 + $0x20] sm:$0xff]
    %v457 = vld [vmem:[#allocation13 + $0x28] sm:$0xff]
    %v458 = vld [vmem:[#allocation13 + $0x30] sm:$0xff]
    %v459 = vld [vmem:[#allocation13 + $0x38] sm:$0xff]
    %vm460 = vcmask 523264
    %v462 = vsel %vm460, %v443, 0
    %464 = vmatprep.subr.mxu0 0.0
    %465 = vmatpush1.msra.mxu0 %v452
    %466 = vmatprep.subr.mxu0 0.0
    %467 = vmatpush1.msra.mxu0 %v453
    %468 = vmatprep.subr.mxu0 0.0
    %469 = vmatpush1.msra.mxu0 %v454
    %470 = vmatprep.subr.mxu0 0.0
    %471 = vmatpush1.msra.mxu0 %v455
    %472 = vmatprep.subr.mxu0 0.0
    %473 = vmatpush1.msra.mxu0 %v456
    %474 = vmatprep.subr.mxu0 0.0
    %475 = vmatpush1.msra.mxu0 %v457
    %476 = vmatprep.subr.mxu0 0.0
    %477 = vmatpush1.msra.mxu0 %v458
    %478 = vmatprep.subr.mxu0 0.0
    %479 = vmatpush1.msra.mxu0 %v459
    %480 = vmatprep.subr.mxu0 0.0
    %481 = vmatpush1.msra.mxu0 0.0
    %482 = vmatprep.subr.mxu0 0.0
    %483 = vmatpush1.msra.mxu0 0.0
    %484 = vmatprep.subr.mxu0 0.0
    %485 = vmatpush1.msra.mxu0 0.0
    %486 = vmatprep.subr.mxu0 0.0
    %487 = vmatpush1.msra.mxu0 0.0
    %488 = vmatprep.subr.mxu0 0.0
    %489 = vmatpush1.msra.mxu0 0.0
    %490 = vmatprep.subr.mxu0 0.0
    %491 = vmatpush1.msra.mxu0 0.0
    %492 = vmatprep.subr.mxu0 0.0
    %493 = vmatpush1.msra.mxu0 0.0
    %494 = vmatprep.subr.mxu0 0.0
    %495 = vmatpush1.msra.mxu0 0.0
    %496 = vmatprep.subr.mxu0 0.0
    %497 = vmatpush1.msra.mxu0 0.0
    %498 = vmatprep.subr.mxu0 0.0
    %499 = vmatpush1.msra.mxu0 0.0
    %500 = vmatprep.subr.mxu0 0.0
    %501 = vmatpush1.msra.mxu0 0.0
    %502 = vmatprep.subr.mxu0 0.0
    %503 = vmatpush1.msra.mxu0 0.0
    %504 = vmatprep.subr.mxu0 0.0
    %505 = vmatpush1.msra.mxu0 0.0
    %506 = vmatprep.subr.mxu0 0.0
    %507 = vmatpush1.msra.mxu0 0.0
    %508 = vmatprep.subr.mxu0 0.0
    %509 = vmatpush1.msra.mxu0 0.0
    %510 = vmatprep.subr.mxu0 0.0
    %511 = vmatpush1.msra.mxu0 0.0
    %512 = vmatprep.subr.mxu0 0.0
    %513 = vmatpush1.msra.mxu0 0.0
    %514 = vmatprep.subr.mxu0 0.0
    %515 = vmatpush1.msra.mxu0 0.0
    %516 = vmatprep.subr.mxu0 0.0
    %517 = vmatpush1.msra.mxu0 0.0
    %518 = vmatprep.subr.mxu0 0.0
    %519 = vmatpush1.msra.mxu0 0.0
    %520 = vmatprep.subr.mxu0 0.0
    %521 = vmatpush1.msra.mxu0 0.0
    %522 = vmatprep.subr.mxu0 0.0
    %523 = vmatpush1.msra.mxu0 0.0
    %524 = vmatprep.subr.mxu0 0.0
    %525 = vmatpush1.msra.mxu0 0.0
    %526 = vmatprep.subr.mxu0 0.0
    %527 = vmatpush1.msra.mxu0 0.0
    %528 = vmatprep.mubr.f32.mxu0 0.0
    %529 = vmatmul.mubr.f32.gmra.mrb[0].mxu0 %v462
    %v530 = vpop.f32.mrb[0].mxu0
    %v531 = vadd.f32 0.0, %v530
    %v532 = vpop.f32.mrb[0].mxu0
    %533 = vdwg.mxu0
    %v535 = vsel %vm460, %v439, 0
    %537 = vmatprep.subr.mxu0 0.0
    %538 = vmatpush1.msra.mxu0 %v444
    %539 = vmatprep.subr.mxu0 0.0
    %540 = vmatpush1.msra.mxu0 %v445
    %541 = vmatprep.subr.mxu0 0.0
    %542 = vmatpush1.msra.mxu0 %v446
    %543 = vmatprep.subr.mxu0 0.0
    %544 = vmatpush1.msra.mxu0 %v447
    %545 = vmatprep.subr.mxu0 0.0
    %546 = vmatpush1.msra.mxu0 %v448
    %547 = vmatprep.subr.mxu0 0.0
    %548 = vmatpush1.msra.mxu0 %v449
    %549 = vmatprep.subr.mxu0 0.0
    %550 = vmatpush1.msra.mxu0 %v450
    %551 = vmatprep.subr.mxu0 0.0
    %552 = vmatpush1.msra.mxu0 %v451
    %553 = vmatprep.subr.mxu0 0.0
    %554 = vmatpush1.msra.mxu0 0.0
    %555 = vmatprep.subr.mxu0 0.0
    %556 = vmatpush1.msra.mxu0 0.0
    %557 = vmatprep.subr.mxu0 0.0
    %558 = vmatpush1.msra.mxu0 0.0
    %559 = vmatprep.subr.mxu0 0.0
    %560 = vmatpush1.msra.mxu0 0.0
    %561 = vmatprep.subr.mxu0 0.0
    %562 = vmatpush1.msra.mxu0 0.0
    %563 = vmatprep.subr.mxu0 0.0
    %564 = vmatpush1.msra.mxu0 0.0
    %565 = vmatprep.subr.mxu0 0.0
    %566 = vmatpush1.msra.mxu0 0.0
    %567 = vmatprep.subr.mxu0 0.0
    %568 = vmatpush1.msra.mxu0 0.0
    %569 = vmatprep.subr.mxu0 0.0
    %570 = vmatpush1.msra.mxu0 0.0
    %571 = vmatprep.subr.mxu0 0.0
    %572 = vmatpush1.msra.mxu0 0.0
    %573 = vmatprep.subr.mxu0 0.0
    %574 = vmatpush1.msra.mxu0 0.0
    %575 = vmatprep.subr.mxu0 0.0
    %576 = vmatpush1.msra.mxu0 0.0
    %577 = vmatprep.subr.mxu0 0.0
    %578 = vmatpush1.msra.mxu0 0.0
    %579 = vmatprep.subr.mxu0 0.0
    %580 = vmatpush1.msra.mxu0 0.0
    %581 = vmatprep.subr.mxu0 0.0
    %582 = vmatpush1.msra.mxu0 0.0
    %583 = vmatprep.subr.mxu0 0.0
    %584 = vmatpush1.msra.mxu0 0.0
    %585 = vmatprep.subr.mxu0 0.0
    %586 = vmatpush1.msra.mxu0 0.0
    %587 = vmatprep.subr.mxu0 0.0
    %588 = vmatpush1.msra.mxu0 0.0
    %589 = vmatprep.subr.mxu0 0.0
    %590 = vmatpush1.msra.mxu0 0.0
    %591 = vmatprep.subr.mxu0 0.0
    %592 = vmatpush1.msra.mxu0 0.0
    %593 = vmatprep.subr.mxu0 0.0
    %594 = vmatpush1.msra.mxu0 0.0
    %595 = vmatprep.subr.mxu0 0.0
    %596 = vmatpush1.msra.mxu0 0.0
    %597 = vmatprep.subr.mxu0 0.0
    %598 = vmatpush1.msra.mxu0 0.0
    %599 = vmatprep.subr.mxu0 0.0
    %600 = vmatpush1.msra.mxu0 0.0
    %601 = vmatprep.mubr.f32.mxu0 0.0
    %602 = vmatmul.mubr.f32.gmra.mrb[0].mxu0 %v535
    %v603 = vpop.f32.mrb[0].mxu0
    %v604 = vadd.f32 %v531, %v603
    %v605 = vpop.f32.mrb[0].mxu0
    %606 = vdwg.mxu0
    %v607 = vld [vmem:[%s8] sm:$0x1]
    %v609 = vlaneseq
    %v610 = vshrl.u32 %v609, 7
    %v611 = vsub.s32 0, %v610
    %v612 = vrot.slane %v607, %v611
    %v614 = vadd.f32 %v604, %v612
    %v615 = vmul.f32 %v614, %v614
    %vm616 = vcmask 1043456
    %v617 = vsel %vm616, %v615, 0.0
    %618 = vadd.xlane.f32.xlu0 %v617
    %v619 = vpop.xlane.xlu0 %618
    %v620 = vmax.f32 %v619, 1e-24
    %v621 = vrsqrt.pop %v620
    %v622 = vmul.f32 %v614, %v621
    %v623 = vmax.f32 %v622, 0.0
    %v624 = vsel %vm224, %v623, -inf
    %v625 = vrot.slane %v624, 4
    %v626 = vmax.f32 %v624, %v625
    %v627 = vrot.slane %v626, 2
    %v628 = vmax.f32 %v626, %v627
    %v629 = vrot.slane %v628, 1
    %v630 = vmax.f32 %v628, %v629
    %vm631 = vcmask 1043458
    %v632 = vsel %vm631, %v623, -inf
    %v633 = vrot.slane %v632, 4
    %v634 = vmax.f32 %v632, %v633
    %v635 = vrot.slane %v634, 2
    %v636 = vmax.f32 %v634, %v635
    %v637 = vrot.slane %v636, 1
    %v638 = vmax.f32 %v636, %v637
    %v639 = vsel %vm222, %v630, %v638
    %640 = vst [vmem:[#allocation15] sm:$0x3] %v639
    // Predicated region
    $region62: #{tpu_custom_call.1} parent=1 // pred_check
      _
    $region63: #{tpu_custom_call.1} parent=1 // pred_check_branch
      %642 = sbr.rel (0) target = $region65
    $region64: #{tpu_custom_call.1} parent=1 // pred_region
      %s644 = ssub.s32 32, 32
      %645 = vsyncadd [#allocation6], %s644
      %s647 = sshll.u32 [#allocation15], 4
      %s648 = int_to_ptr.vmem [resolvable:$true] %s647
      %650 = dma.vmem_to_hbm [thread:$0]  %s648, 32, %s9, [#allocation6]
    $region65: #{tpu_custom_call.1} parent=1 // pred_fallthru
      _
    // Predicated region
    $region66: #{tpu_custom_call.1} parent=1 // pred_check
      _
    $region67: #{tpu_custom_call.1} parent=1 // pred_check_branch
      %652 = sbr.rel (0) target = $region69
    $region68: #{tpu_custom_call.1} parent=1 // pred_region
      %653 = dma.done [#allocation6], 32
    $region69: #{tpu_custom_call.1} parent=1 // pred_fallthru
      _
    %654 = vsyncpa [#allocation5], 1
    %655 = vsyncpa [#allocation8], 1
    %656 = vsyncpa [#allocation11], 1
    %657 = vsyncpa [#allocation14], 1
    %658 = vsyncpa [#allocation6], 1

</llo_original>
